<compile_context>
chip_gen: v7x
topology: tpu7x:2x2x1
jax: 0.10.0
libtpu: 0.0.40
codegen_flags: <defaults>
</compile_context>

<pallas_src>
import functools

import jax
import jax.numpy as jnp
from jax.experimental import pallas as pl
from jax.experimental.pallas import tpu as pltpu


# --------------------------------------------------------------------------
# Kernels
# --------------------------------------------------------------------------
def _linear_kernel_resident(x_ref, s_ref, res_ref, out_ref, *, compute_dtype):
    """out = res + x @ S with the full symmetric S resident in VMEM."""
    x = x_ref[...].astype(compute_dtype)
    acc = jnp.dot(x, s_ref[...], preferred_element_type=jnp.float32)
    out_ref[...] = (res_ref[...].astype(jnp.float32) + acc).astype(out_ref.dtype)


def _linear_kernel_tiled(x_ref, s_ref, res_ref, out_ref, *, compute_dtype):
    """Large-dim fallback: accumulate over the K grid axis directly into the
    resident (f32) output block.  Initialized from the residual at k == 0, so
    no scratch accumulator and no epilogue add are needed."""
    k = pl.program_id(2)

    @pl.when(k == 0)
    def _init():
        out_ref[...] = res_ref[...].astype(out_ref.dtype)

    x = x_ref[...].astype(compute_dtype)
    # NOTE: output dtype is f32 for this module, so accumulating into out_ref
    # keeps full precision; a lower-precision output would need a f32 scratch.
    out_ref[...] += jnp.dot(
        x, s_ref[...], preferred_element_type=jnp.float32
    ).astype(out_ref.dtype)


# --------------------------------------------------------------------------
# Device-aware tile / VMEM selection (static, outside jit).
# --------------------------------------------------------------------------
def _device_kind():
    try:
        return jax.devices()[0].device_kind.lower()
    except Exception:
        return ""


def _is_v7(kind):
    return ("v7" in kind) or ("7x" in kind)


def _is_v5(kind):
    return "v5" in kind


def _vmem_budget(kind):
    # v7x TensorCore has 64 MiB physical VMEM; v5e/v6e have 128 MiB.
    return (56 << 20) if _is_v7(kind) else (100 << 20)


def _vmem_limit(need_bytes, budget):
    # Small headroom for Mosaic internal scratch; no oversized floor.
    return int(min(max(need_bytes + (4 << 20), 8 << 20), budget))


def _pick_batch_tile(b, kind):
    if _is_v5(kind):
        # v5e is the most HBM-bound: grow tiles with batch (128 -> 512).
        target = 512 if b >= 512 else (256 if b >= 256 else 128)
    else:
        target = 256  # v6e / v7x: matches the 2x256^2 MXU height
    tile = b if b <= target else target
    # v7x: expose >= 2 blocks on the parallel grid axis so both TensorCores
    # get work (a single-step parallel grid leaves one TC idle).
    if _is_v7(kind) and b >= 16 and pl.cdiv(b, tile) < 2:
        tile = (((b + 1) // 2) + 7) // 8 * 8
    return max(tile, 1)


def _fits_resident(b_tile, dim, x_isz, s_isz, r_isz, budget):
    s_bytes = 2 * dim * dim * s_isz                     # S (double-buffered)
    io_bytes = 2 * b_tile * dim * (x_isz + 2 * r_isz)   # x + res + out
    return s_bytes + io_bytes + (2 << 20) <= budget


def _pick_tiled(dim, b_tile, x_isz, s_isz, r_isz, kind, budget):
    """Tile sizes for the large-dim (batch, N, K) fallback."""
    if _is_v7(kind):
        n_target, k_target = 512, 512
    else:
        n_target, k_target = 1024, 1024   # 128 MiB VMEM: bigger lane-dense tiles
    block_n = dim if dim <= n_target else n_target
    # K (reduction) tiles must divide dim exactly: a partial K tile would feed
    # garbage into the accumulation of VALID output lanes.
    block_k = dim
    if dim > k_target:
        for t in (1024, 896, 768, 640, 512, 384, 256, 128):
            if t <= k_target and dim % t == 0:
                block_k = t
                break

    def need(bn, bk, bb):
        return (2 * bb * bk * x_isz          # x tile (double-buffered)
                + 2 * bk * bn * s_isz        # S tile
                + 4 * bb * bn * r_isz        # res + out tiles
                + (2 << 20))

    # Guard: un-tiled-K fallback (block_k == dim) with a large block_n can
    # exceed the VMEM cap -> shrink N, then the batch tile.
    while need(block_n, block_k, b_tile) > budget and block_n > 128:
        block_n = max(128, block_n // 2)
    while need(block_n, block_k, b_tile) > budget and b_tile > 8:
        b_tile = max(8, b_tile // 2)
    return b_tile, block_n, block_k, need(block_n, block_k, b_tile)


# --------------------------------------------------------------------------
# Pallas call (jitted; all tiling decisions are static).
# --------------------------------------------------------------------------
def _forward_impl(x, s, res, block_b, block_n, block_k, resident, vmem_limit):
    b, dim = x.shape
    compute_dtype = s.dtype   # bf16 if the module caches S in bf16, else f32

    if resident:
        kernel = functools.partial(
            _linear_kernel_resident, compute_dtype=compute_dtype)
        grid = (pl.cdiv(b, block_b),)
        in_specs = [
            pl.BlockSpec((block_b, dim), lambda i: (i, 0)),   # x
            pl.BlockSpec((dim, dim), lambda i: (0, 0)),       # S (resident)
            pl.BlockSpec((block_b, dim), lambda i: (i, 0)),   # res
        ]
        out_specs = pl.BlockSpec((block_b, dim), lambda i: (i, 0))
        dims = ("parallel",)
    else:
        kernel = functools.partial(
            _linear_kernel_tiled, compute_dtype=compute_dtype)
        grid = (pl.cdiv(b, block_b), pl.cdiv(dim, block_n), pl.cdiv(dim, block_k))
        in_specs = [
            pl.BlockSpec((block_b, block_k), lambda i, j, k: (i, k)),  # x
            pl.BlockSpec((block_k, block_n), lambda i, j, k: (k, j)),  # S
            pl.BlockSpec((block_b, block_n), lambda i, j, k: (i, j)),  # res
        ]
        out_specs = pl.BlockSpec((block_b, block_n), lambda i, j, k: (i, j))
        dims = ("parallel", "parallel", "arbitrary")

    return pl.pallas_call(
        kernel,
        out_shape=jax.ShapeDtypeStruct((b, dim), res.dtype),
        grid_spec=pltpu.PrefetchScalarGridSpec(
            num_scalar_prefetch=0,
            grid=grid,
            in_specs=in_specs,
            out_specs=out_specs,
        ),
        # out = res + x @ S is accumulate-into: alias the residual buffer.
        input_output_aliases={2: 0},
        compiler_params=pltpu.CompilerParams(
            dimension_semantics=dims,
            vmem_limit_bytes=vmem_limit,
        ),
    )(x, s, res)


_STATIC = ("block_b", "block_n", "block_k", "resident", "vmem_limit")


@functools.partial(jax.jit, static_argnames=_STATIC)
def _forward(x, s, res, *, block_b, block_n, block_k, resident, vmem_limit):
    return _forward_impl(x, s, res, block_b, block_n, block_k, resident,
                         vmem_limit)


# Donating variant: makes the residual aliasing truly in-place (no defensive
# copy from XLA).  Only valid if the caller does not reuse the residual array.
@functools.partial(jax.jit, static_argnames=_STATIC, donate_argnums=(2,))
def _forward_donated(x, s, res, *, block_b, block_n, block_k, resident,
                     vmem_limit):
    return _forward_impl(x, s, res, block_b, block_n, block_k, resident,
                         vmem_limit)


def _matmul_sym_add(x, s, res, donate_residual=False):
    """res + x @ S, where S is already symmetric."""
    b, dim = x.shape
    assert s.shape == (dim, dim)
    assert res.shape == (b, dim)

    kind = _device_kind()
    budget = _vmem_budget(kind)
    x_isz = jnp.dtype(x.dtype).itemsize
    s_isz = jnp.dtype(s.dtype).itemsize
    r_isz = jnp.dtype(res.dtype).itemsize

    block_b = _pick_batch_tile(b, kind)
    if _fits_resident(block_b, dim, x_isz, s_isz, r_isz, budget):
        resident = True
        block_n = block_k = dim
        need = 2 * dim * dim * s_isz + 2 * block_b * dim * (x_isz + 2 * r_isz)
    else:
        resident = False
        block_b, block_n, block_k, need = _pick_tiled(
            dim, block_b, x_isz, s_isz, r_isz, kind, budget)

    # TODO(synk): for tiny dim (< 128 lanes, e.g. dim=32) the output stores are
    # masked partial stores; fusing the upper/lower pair or padding dim to 128
    # would make them lane-dense, but these sizes are launch-overhead dominated
    # anyway.
    fwd = _forward_donated if donate_residual else _forward
    return fwd(x, s, res, block_b=block_b, block_n=block_n, block_k=block_k,
               resident=resident, vmem_limit=_vmem_limit(need, budget))


# --------------------------------------------------------------------------
# Module wrapper.
# --------------------------------------------------------------------------
class LinearPallas:
    """JAX/Pallas counterpart of sympnet.model.Linear."""

    def __init__(self, dim, kind="upper", key=None,
                 compute_dtype=jnp.float32, donate_residual=False):
        assert kind in ("upper", "lower")
        self._kind = kind
        self._dim = dim
        self._compute_dtype = jnp.dtype(compute_dtype)
        self._donate_residual = donate_residual
        if key is None:
            key = jax.random.PRNGKey(0)
        # nn.init.normal_(self._A): standard normal, deterministic here.
        self.A = jax.random.normal(key, (dim, dim), dtype=jnp.float32)
        self._S = None
        self._refresh_S()

    def _refresh_S(self):
        # Cache S = A + A.T once; recompute only when A changes (avoids a
        # per-call dim^2 transpose+add plus an extra HBM write/read of S).
        self._S = (self.A + self.A.T).astype(self._compute_dtype)

    def update_A(self, A):
        self.A = A
        self._refresh_S()

    def __call__(self, p, q):
        if self._kind == "upper":
            p_new = _matmul_sym_add(q, self._S, p, self._donate_residual)
            q_new = q
        else:
            p_new = p
            q_new = _matmul_sym_add(p, self._S, q, self._donate_residual)
        return p_new, q_new


def _reference(p, q, A, kind):
    S = A + A.T
    mm = lambda x: jnp.matmul(x, S, precision=jax.lax.Precision.HIGHEST)
    if kind == "upper":
        return p + mm(q), q
    return p, mm(p) + q


if __name__ == "__main__":
    key = jax.random.PRNGKey(0)
    ok = True
    # Small canonical case + a partial-tile case (batch not a multiple of the
    # batch tile, dim not a multiple of 128) to lock in masked-store handling.
    for batch, dim in ((8, 32), (280, 96)):
        k_a, k_p, k_q = jax.random.split(jax.random.fold_in(key, dim), 3)
        p = jax.random.normal(k_p, (batch, dim), dtype=jnp.float32)
        q = jax.random.normal(k_q, (batch, dim), dtype=jnp.float32)

        for kind in ("upper", "lower"):
            mod = LinearPallas(dim, kind=kind, key=k_a)
            p_new, q_new = jax.block_until_ready(mod(p, q))

            p_ref, q_ref = _reference(p, q, mod.A, kind)
            ok &= bool(jnp.allclose(p_new, p_ref, atol=1e-3, rtol=1e-3))
            ok &= bool(jnp.allclose(q_new, q_ref, atol=1e-3, rtol=1e-3))

    if ok:
        print("KERNEL_OK")
    else:
        print("KERNEL_MISMATCH")
</pallas_src>

<mosaic_0001>
module attributes {stable_mosaic.version = 11 : i64} {
  func.func @_linear_kernel_resident(%arg0: i32, %arg1: memref<8x32xf32, #tpu.memory_space<vmem>>, %arg2: memref<32x32xf32, #tpu.memory_space<vmem>>, %arg3: memref<8x32xf32, #tpu.memory_space<vmem>>, %arg4: memref<8x32xf32, #tpu.memory_space<vmem>>) attributes {dimension_semantics = [#tpu.dimension_semantics<parallel>], iteration_bounds = array<i64: 1>, scalar_prefetch = 0 : i64, scratch_operands = 0 : i64, tpu.core_type = #tpu.core_type<tc>, window_params = [{transform_indices = @transform_0, window_bounds = array<i64: 8, 32>}, {pipeline_mode = #tpu.pipeline_mode<synchronous>, transform_indices = @transform_1, window_bounds = array<i64: 32, 32>}, {transform_indices = @transform_2, window_bounds = array<i64: 8, 32>}, {transform_indices = @transform_3, window_bounds = array<i64: 8, 32>}]} {
    %c0 = arith.constant 0 : index
    %c0_0 = arith.constant 0 : index
    %0 = vector.load %arg1[%c0, %c0_0] : memref<8x32xf32, #tpu.memory_space<vmem>>, vector<8x32xf32>
    %c0_1 = arith.constant 0 : index
    %c0_2 = arith.constant 0 : index
    %1 = vector.load %arg2[%c0_1, %c0_2] : memref<32x32xf32, #tpu.memory_space<vmem>>, vector<32x32xf32>
    %cst = arith.constant dense<0.000000e+00> : vector<8x32xf32>
    %2 = tpu.matmul %0, %1, %cst {dimension_numbers = #tpu.dot_dimension_numbers<[1], [0], [0], [1], [0, 0, 1, 1], [], []>} : vector<8x32xf32>, vector<32x32xf32>, vector<8x32xf32> -> vector<8x32xf32>
    %c0_3 = arith.constant 0 : index
    %c0_4 = arith.constant 0 : index
    %3 = vector.load %arg3[%c0_3, %c0_4] : memref<8x32xf32, #tpu.memory_space<vmem>>, vector<8x32xf32>
    %4 = arith.addf %3, %2 : vector<8x32xf32>
    %c0_5 = arith.constant 0 : index
    %c0_6 = arith.constant 0 : index
    %5 = vector.load %arg4[%c0_5, %c0_6] : memref<8x32xf32, #tpu.memory_space<vmem>>, vector<8x32xf32>
    tpu.vector_store %arg4[%c0_5, %c0_6], %4 {strides = array<i32>} : memref<8x32xf32, #tpu.memory_space<vmem>>, vector<8x32xf32>,
    return
  }
  func.func @transform_0(%arg0: i32) -> (i32, i32) {
    %c0_i32 = arith.constant 0 : i32
    %c0_i32_0 = arith.constant 0 : i32
    return %arg0, %c0_i32 : i32, i32
  }
  func.func @transform_1(%arg0: i32) -> (i32, i32) {
    %c0_i32 = arith.constant 0 : i32
    %c0_i32_0 = arith.constant 0 : i32
    %c0_i32_1 = arith.constant 0 : i32
    return %c0_i32, %c0_i32_0 : i32, i32
  }
  func.func @transform_2(%arg0: i32) -> (i32, i32) {
    %c0_i32 = arith.constant 0 : i32
    %c0_i32_0 = arith.constant 0 : i32
    return %arg0, %c0_i32 : i32, i32
  }
  func.func @transform_3(%arg0: i32) -> (i32, i32) {
    %c0_i32 = arith.constant 0 : i32
    %c0_i32_0 = arith.constant 0 : i32
    return %arg0, %c0_i32 : i32, i32
  }
}

</mosaic_0001>

<llo_original>
// kernel: _forward.1
$region0: #{_forward.1}
  #allocation0 [shape = 'u32[]', space=smem, size = 0x4, offset = 0x4, fixed_abs, tag = 'smem constant byte address 0x4 - core index']
  #allocation1 [shape = 'u32[144,128]{1,0:T(1,128)}', space=vmem, size = 0x12000, scoped, tag = 'internal scratch']
  %s0 = inlined_call_operand.vmem [shape: f32[8,32], index: 0, kind: input, shape index: {}]
  %s1 = inlined_call_operand.hbm [shape: f32[32,32], index: 1, kind: input, shape index: {}]
  %s2 = inlined_call_operand.hbm [shape: f32[8,32], index: 2, kind: input, shape index: {}, may-alias: {2,3}]
  %s3 = inlined_call_operand.hbm [shape: f32[8,32], index: 3, kind: output, shape index: {}, may-alias: {2,3}]
  %s4 = sld [smem:[#allocation0]]
  $region30: #{_forward.1} parent=0
    _
  %s6 = ssub.s32 1, %s4
  %s7 = scalar_select 0, %s6, %s4
  $region1: #{_forward.1} parent=0
    #allocation2 [shape = 'u8[16384]{0}', space=vmem, size = 0x4000, scoped, tag = 'input window, operand 1, single buffered']
    #allocation3 [shape = 's32[1]{0}', space=sflag, size = 0x4, scoped, tag = 'scoped memory for _forward.1']
    #allocation4 [shape = 's32[1]{0}', space=sflag, size = 0x4, scoped, tag = 'scoped memory for _forward.1']
    #allocation5 [shape = 'u8[4096]{0}', space=vmem, size = 0x1000, scoped, tag = 'input window, operand 2, single buffered']
    #allocation6 [shape = 's32[1]{0}', space=sflag, size = 0x4, scoped, tag = 'scoped memory for _forward.1']
    #allocation7 [shape = 'u8[4096]{0}', space=vmem, size = 0x1000, scoped, tag = 'output window, operand 0, single buffered']
    %8 = vsyncpa [#allocation3], 0
    %9 = vsyncpa [#allocation6], 0
    %10 = vsyncpa [#allocation4], 0
    // Predicated region
    $region2: #{_forward.1} parent=1 // pred_check
      _
    $region3: #{_forward.1} parent=1 // pred_check_branch
      %12 = sbr.rel (0) target = $region5
    $region4: #{_forward.1} parent=1 // pred_region
      _
    $region5: #{_forward.1} parent=1 // pred_fallthru
      _
    // Predicated region
    $region6: #{_forward.1} parent=1 // pred_check
      _
    $region7: #{_forward.1} parent=1 // pred_check_branch
      %14 = sbr.rel (0) target = $region9
    $region8: #{_forward.1} parent=1 // pred_region
      %s16 = ssub.s32 512, 512
      %17 = vsyncadd [#allocation3], %s16
      %s18 = sshll.u32 [#allocation2], 4
      %s19 = int_to_ptr.vmem [resolvable:$true] %s18
      %24 = dma.hbm_to_vmem [thread:$0]  %s1, 512, %s19, [#allocation3], 128, 128, 8
    $region9: #{_forward.1} parent=1 // pred_fallthru
      _
    // Predicated region
    $region10: #{_forward.1} parent=1 // pred_check
      _
    $region11: #{_forward.1} parent=1 // pred_check_branch
      %26 = sbr.rel (0) target = $region13
    $region12: #{_forward.1} parent=1 // pred_region
      %s28 = ssub.s32 128, 128
      %29 = vsyncadd [#allocation6], %s28
      %s31 = sshll.u32 [#allocation5], 4
      %s32 = int_to_ptr.vmem [resolvable:$true] %s31
      %34 = dma.hbm_to_vmem [thread:$0]  %s2, 128, %s32, [#allocation6]
    $region13: #{_forward.1} parent=1 // pred_fallthru
      _
    // Predicated region
    $region14: #{_forward.1} parent=1 // pred_check
      _
    $region15: #{_forward.1} parent=1 // pred_check_branch
      %36 = sbr.rel (0) target = $region17
    $region16: #{_forward.1} parent=1 // pred_region
      %37 = dma.done [#allocation3], 512
    $region17: #{_forward.1} parent=1 // pred_fallthru
      _
    // Predicated region
    $region18: #{_forward.1} parent=1 // pred_check
      _
    $region19: #{_forward.1} parent=1 // pred_check_branch
      %39 = sbr.rel (0) target = $region21
    $region20: #{_forward.1} parent=1 // pred_region
      %40 = dma.done [#allocation6], 128
    $region21: #{_forward.1} parent=1 // pred_fallthru
      _
    %v41 = vld [vmem:[%s0] sm:$0xff]
    %v42 = vld [vmem:[#allocation2] sm:$0xff]
    %v43 = vld [vmem:[#allocation2 + $0x8] sm:$0xff]
    %v44 = vld [vmem:[#allocation2 + $0x10] sm:$0xff]
    %v45 = vld [vmem:[#allocation2 + $0x18] sm:$0xff]
    %vm46 = vcmask 261120
    %v48 = vsel %vm46, %v41, 0
    %50 = vmatprep.subr.mxu0 0.0
    %51 = vmatpush1.msra.mxu0 %v42
    %52 = vmatprep.subr.mxu0 0.0
    %53 = vmatpush1.msra.mxu0 %v43
    %54 = vmatprep.subr.mxu0 0.0
    %55 = vmatpush1.msra.mxu0 %v44
    %56 = vmatprep.subr.mxu0 0.0
    %57 = vmatpush1.msra.mxu0 %v45
    %58 = vmatprep.subr.mxu0 0.0
    %59 = vmatpush1.msra.mxu0 0.0
    %60 = vmatprep.subr.mxu0 0.0
    %61 = vmatpush1.msra.mxu0 0.0
    %62 = vmatprep.subr.mxu0 0.0
    %63 = vmatpush1.msra.mxu0 0.0
    %64 = vmatprep.subr.mxu0 0.0
    %65 = vmatpush1.msra.mxu0 0.0
    %66 = vmatprep.subr.mxu0 0.0
    %67 = vmatpush1.msra.mxu0 0.0
    %68 = vmatprep.subr.mxu0 0.0
    %69 = vmatpush1.msra.mxu0 0.0
    %70 = vmatprep.subr.mxu0 0.0
    %71 = vmatpush1.msra.mxu0 0.0
    %72 = vmatprep.subr.mxu0 0.0
    %73 = vmatpush1.msra.mxu0 0.0
    %74 = vmatprep.subr.mxu0 0.0
    %75 = vmatpush1.msra.mxu0 0.0
    %76 = vmatprep.subr.mxu0 0.0
    %77 = vmatpush1.msra.mxu0 0.0
    %78 = vmatprep.subr.mxu0 0.0
    %79 = vmatpush1.msra.mxu0 0.0
    %80 = vmatprep.subr.mxu0 0.0
    %81 = vmatpush1.msra.mxu0 0.0
    %82 = vmatprep.subr.mxu0 0.0
    %83 = vmatpush1.msra.mxu0 0.0
    %84 = vmatprep.subr.mxu0 0.0
    %85 = vmatpush1.msra.mxu0 0.0
    %86 = vmatprep.subr.mxu0 0.0
    %87 = vmatpush1.msra.mxu0 0.0
    %88 = vmatprep.subr.mxu0 0.0
    %89 = vmatpush1.msra.mxu0 0.0
    %90 = vmatprep.subr.mxu0 0.0
    %91 = vmatpush1.msra.mxu0 0.0
    %92 = vmatprep.subr.mxu0 0.0
    %93 = vmatpush1.msra.mxu0 0.0
    %94 = vmatprep.subr.mxu0 0.0
    %95 = vmatpush1.msra.mxu0 0.0
    %96 = vmatprep.subr.mxu0 0.0
    %97 = vmatpush1.msra.mxu0 0.0
    %98 = vmatprep.subr.mxu0 0.0
    %99 = vmatpush1.msra.mxu0 0.0
    %100 = vmatprep.subr.mxu0 0.0
    %101 = vmatpush1.msra.mxu0 0.0
    %102 = vmatprep.subr.mxu0 0.0
    %103 = vmatpush1.msra.mxu0 0.0
    %104 = vmatprep.subr.mxu0 0.0
    %105 = vmatpush1.msra.mxu0 0.0
    %106 = vmatprep.subr.mxu0 0.0
    %107 = vmatpush1.msra.mxu0 0.0
    %108 = vmatprep.subr.mxu0 0.0
    %109 = vmatpush1.msra.mxu0 0.0
    %110 = vmatprep.subr.mxu0 0.0
    %111 = vmatpush1.msra.mxu0 0.0
    %112 = vmatprep.subr.mxu0 0.0
    %113 = vmatpush1.msra.mxu0 0.0
    %114 = vmatprep.mubr.f32.mxu0 0.0
    %115 = vmatmul.mubr.f32.gmra.mrb[0].mxu0 %v48
    %v116 = vpop.f32.mrb[0].mxu0
    %v117 = vadd.f32 0.0, %v116
    %v118 = vpop.f32.mrb[0].mxu0
    %119 = vdwg.mxu0
    %v120 = vld [vmem:[#allocation5] sm:$0xff]
    %v121 = vadd.f32 %v120, %v117
    %122 = vst.msk [vmem:[#allocation7] sm:$0xff] %vm46, %v121
    // Predicated region
    $region22: #{_forward.1} parent=1 // pred_check
      _
    $region23: #{_forward.1} parent=1 // pred_check_branch
      %124 = sbr.rel (0) target = $region25
    $region24: #{_forward.1} parent=1 // pred_region
      %s126 = ssub.s32 128, 128
      %127 = vsyncadd [#allocation4], %s126
      %s129 = sshll.u32 [#allocation7], 4
      %s130 = int_to_ptr.vmem [resolvable:$true] %s129
      %132 = dma.vmem_to_hbm [thread:$0]  %s130, 128, %s3, [#allocation4]
    $region25: #{_forward.1} parent=1 // pred_fallthru
      _
    // Predicated region
    $region26: #{_forward.1} parent=1 // pred_check
      _
    $region27: #{_forward.1} parent=1 // pred_check_branch
      %134 = sbr.rel (0) target = $region29
    $region28: #{_forward.1} parent=1 // pred_region
      %135 = dma.done [#allocation4], 128
    $region29: #{_forward.1} parent=1 // pred_fallthru
      _
    %136 = vsyncpa [#allocation3], 1
    %137 = vsyncpa [#allocation6], 1
    %138 = vsyncpa [#allocation4], 1

</llo_original>
